<compile_context>
chip_gen: v6e
topology: v6e:2x2x1
jax: 0.10.0
libtpu: 0.0.40
codegen_flags: <defaults>
</compile_context>

<pallas_src>
import jax
import jax.numpy as jnp
from jax.experimental import pallas as pl
from jax.experimental.pallas import tpu as pltpu


def _rmsnorm_kernel(eps):
    def kernel(x_ref, w_ref, o_ref):
        input_dtype = x_ref.dtype
        # Upcast to float32 for the reduction (matches .to(torch.float32)).
        x = x_ref[...].astype(jnp.float32)
        variance = jnp.mean(x * x, axis=-1, keepdims=True)
        inv = jax.lax.rsqrt(variance + eps)
        normed = x * inv
        # weight * normed.to(input_dtype); output dtype follows promotion.
        o_ref[...] = (w_ref[...] * normed.astype(input_dtype)).astype(o_ref.dtype)

    return kernel


def _sublane_multiple(dtype) -> int:
    # Native sublane packing: 8 for 32-bit, 16 for 16-bit, 32 for 8-bit dtypes.
    return max(8, 32 // jnp.dtype(dtype).itemsize)


def _vmem_capacity_bytes() -> int:
    try:
        cap = getattr(pltpu.get_tpu_info(), "vmem_capacity_bytes", None)
        if cap:
            return int(cap)
    except Exception:
        pass
    return 64 << 20  # conservative fallback (v7x per-TensorCore VMEM)


def _pick_row_tile(n_rows, hidden, x_dtype, out_dtype, buffer_budget_bytes):
    """Largest row tile (multiple of the sublane packing) fitting the VMEM budget."""
    sub = max(_sublane_multiple(x_dtype), _sublane_multiple(out_dtype))
    # Double-buffered input stream + double-buffered output stream, per row.
    bytes_per_row = hidden * 2 * (
        jnp.dtype(x_dtype).itemsize + jnp.dtype(out_dtype).itemsize
    )
    tm_cap = (buffer_budget_bytes // max(bytes_per_row, 1)) // sub * sub
    tm_cap = max(sub, min(1024, tm_cap))

    if n_rows <= tm_cap:
        # Small inputs: one (or a couple of) blocks, no tiling beyond the data.
        if n_rows % sub == 0:
            return n_rows
        tm = (n_rows // sub) * sub
        return tm if tm > 0 else n_rows  # tiny input: block == full array dim

    # Large inputs: keep enough grid steps for pipelining + megacore sharding.
    tm = tm_cap
    while tm > 256 and pl.cdiv(n_rows, tm) < 8:
        tm = max(256, (tm // 2) // sub * sub)
    return tm


def llama_rmsnorm(hidden_states: jax.Array, weight: jax.Array, eps: float = 1e-6):
    """RMSNorm over the last axis of `hidden_states` using a Pallas TPU kernel."""
    orig_shape = hidden_states.shape
    hidden = orig_shape[-1]
    assert weight.shape == (hidden,)

    x2d = hidden_states.reshape(-1, hidden)
    n_rows = x2d.shape[0]

    # Output dtype follows torch's promotion in `weight * x.to(input_dtype)`
    # (f32 weight x bf16 activations -> f32), preserving module semantics.
    out_dtype = jnp.result_type(weight.dtype, hidden_states.dtype)

    # Per-generation VMEM sizing: leave headroom under the physical capacity,
    # and budget roughly half the scoped limit for the pipelined tile buffers.
    vmem_cap = _vmem_capacity_bytes()
    vmem_limit = min((vmem_cap * 3) // 4, 64 << 20)
    buffer_budget = vmem_limit // 2

    tm = _pick_row_tile(n_rows, hidden, x2d.dtype, out_dtype, buffer_budget)
    grid = (pl.cdiv(n_rows, tm),)

    w2d = weight.reshape(1, hidden)

    out2d = pl.pallas_call(
        _rmsnorm_kernel(eps),
        out_shape=jax.ShapeDtypeStruct((n_rows, hidden), out_dtype),
        grid_spec=pltpu.PrefetchScalarGridSpec(
            num_scalar_prefetch=0,
            grid=grid,
            in_specs=[
                pl.BlockSpec((tm, hidden), lambda i: (i, 0)),
                # Constant block index -> fetched once, stays VMEM-resident.
                pl.BlockSpec((1, hidden), lambda i: (0, 0)),
            ],
            out_specs=pl.BlockSpec((tm, hidden), lambda i: (i, 0)),
        ),
        compiler_params=pltpu.CompilerParams(
            dimension_semantics=("parallel",),
            vmem_limit_bytes=vmem_limit,
        ),
    )(x2d, w2d)

    return out2d.reshape(orig_shape[:-1] + (hidden,))


def _reference_rmsnorm(x, weight, eps=1e-6):
    input_dtype = x.dtype
    xf = x.astype(jnp.float32)
    var = jnp.mean(xf * xf, axis=-1, keepdims=True)
    xf = xf * jax.lax.rsqrt(var + eps)
    return weight * xf.astype(input_dtype)


if __name__ == "__main__":
    key = jax.random.PRNGKey(0)
    kx, kw, kx2, kx3 = jax.random.split(key, 4)

    # Primary test: (batch, seq, hidden) as implied by the module's forward.
    batch, seq, hidden = 2, 8, 32
    hidden_states = jax.random.normal(kx, (batch, seq, hidden), dtype=jnp.float32)
    # Parameter init is torch.ones(hidden_size); perturb slightly so the
    # broadcast multiply is actually exercised.
    weight = jnp.ones((hidden,), dtype=jnp.float32) + 0.01 * jax.random.normal(
        kw, (hidden,), dtype=jnp.float32
    )

    out = jax.block_until_ready(llama_rmsnorm(hidden_states, weight, eps=1e-6))
    ref = _reference_rmsnorm(hidden_states, weight, eps=1e-6)
    assert out.shape == hidden_states.shape
    assert out.dtype == ref.dtype
    assert jnp.allclose(out, ref, atol=1e-5, rtol=1e-5), "f32 mismatch vs reference"

    # Row count not a multiple of 8 -> exercises the partial tail block path
    # (replaces the old whole-array-in-one-block fallback).
    x_odd = jax.random.normal(kx2, (13, hidden), dtype=jnp.float32)
    out_odd = jax.block_until_ready(llama_rmsnorm(x_odd, weight, eps=1e-6))
    ref_odd = _reference_rmsnorm(x_odd, weight, eps=1e-6)
    assert jnp.allclose(out_odd, ref_odd, atol=1e-5, rtol=1e-5), "ragged-rows mismatch"

    # bf16 activations with f32 weight: sublane multiple becomes 16 and the
    # output promotes to f32, matching torch's type promotion.
    x_bf16 = jax.random.normal(kx3, (2, 8, 128), dtype=jnp.float32).astype(jnp.bfloat16)
    w_bf = jnp.ones((128,), dtype=jnp.float32)
    out_bf = jax.block_until_ready(llama_rmsnorm(x_bf16, w_bf, eps=1e-6))
    ref_bf = _reference_rmsnorm(x_bf16, w_bf, eps=1e-6)
    assert out_bf.dtype == jnp.float32
    assert jnp.allclose(out_bf, ref_bf, atol=2e-2, rtol=2e-2), "bf16 mismatch"

    print("KERNEL_OK")
</pallas_src>

<mosaic_0001>
module attributes {stable_mosaic.version = 11 : i64} {
  func.func @kernel(%arg0: i32, %arg1: memref<16x32xf32, #tpu.memory_space<vmem>>, %arg2: memref<1x32xf32, #tpu.memory_space<vmem>>, %arg3: memref<16x32xf32, #tpu.memory_space<vmem>>) attributes {dimension_semantics = [#tpu.dimension_semantics<parallel>], iteration_bounds = array<i64: 1>, scalar_prefetch = 0 : i64, scratch_operands = 0 : i64, tpu.core_type = #tpu.core_type<tc>, window_params = [{transform_indices = @transform_0, window_bounds = array<i64: 16, 32>}, {pipeline_mode = #tpu.pipeline_mode<synchronous>, transform_indices = @transform_1, window_bounds = array<i64: 1, 32>}, {transform_indices = @transform_2, window_bounds = array<i64: 16, 32>}]} {
    %c0 = arith.constant 0 : index
    %c0_0 = arith.constant 0 : index
    %0 = vector.load %arg1[%c0, %c0_0] : memref<16x32xf32, #tpu.memory_space<vmem>>, vector<16x32xf32>
    %1 = arith.mulf %0, %0 : vector<16x32xf32>
    %cst = arith.constant dense<0.000000e+00> : vector<16xf32>
    %2 = vector.multi_reduction <add>, %1, %cst [1] : vector<16x32xf32> to vector<16xf32>
    %3 = vector.shape_cast %2 : vector<16xf32> to vector<16x1xf32>
    %cst_1 = arith.constant 3.200000e+01 : f32
    %4 = vector.broadcast %cst_1 : f32 to vector<16x1xf32>
    %5 = arith.divf %3, %4 : vector<16x1xf32>
    %cst_2 = arith.constant 9.99999997E-7 : f32
    %6 = vector.broadcast %cst_2 : f32 to vector<16x1xf32>
    %7 = arith.addf %5, %6 : vector<16x1xf32>
    %8 = math.rsqrt %7 : vector<16x1xf32>
    %9 = vector.broadcast %8 : vector<16x1xf32> to vector<16x32xf32>
    %10 = arith.mulf %0, %9 : vector<16x32xf32>
    %c0_3 = arith.constant 0 : index
    %c0_4 = arith.constant 0 : index
    %11 = vector.load %arg2[%c0_3, %c0_4] : memref<1x32xf32, #tpu.memory_space<vmem>>, vector<1x32xf32>
    %12 = vector.broadcast %11 : vector<1x32xf32> to vector<16x32xf32>
    %13 = arith.mulf %12, %10 : vector<16x32xf32>
    %c0_5 = arith.constant 0 : index
    %c0_6 = arith.constant 0 : index
    %14 = vector.load %arg3[%c0_5, %c0_6] : memref<16x32xf32, #tpu.memory_space<vmem>>, vector<16x32xf32>
    tpu.vector_store %arg3[%c0_5, %c0_6], %13 {strides = array<i32>} : memref<16x32xf32, #tpu.memory_space<vmem>>, vector<16x32xf32>,
    return
  }
  func.func @transform_0(%arg0: i32) -> (i32, i32) {
    %c0_i32 = arith.constant 0 : i32
    %c0_i32_0 = arith.constant 0 : i32
    return %arg0, %c0_i32 : i32, i32
  }
  func.func @transform_1(%arg0: i32) -> (i32, i32) {
    %c0_i32 = arith.constant 0 : i32
    %c0_i32_0 = arith.constant 0 : i32
    %c0_i32_1 = arith.constant 0 : i32
    return %c0_i32, %c0_i32_0 : i32, i32
  }
  func.func @transform_2(%arg0: i32) -> (i32, i32) {
    %c0_i32 = arith.constant 0 : i32
    %c0_i32_0 = arith.constant 0 : i32
    return %arg0, %c0_i32 : i32, i32
  }
}

</mosaic_0001>

<llo_original>
// kernel: tpu_custom_call.1
$region0: #{tpu_custom_call.1}
  #allocation0 [shape = 'u32[]', space=smem, size = 0x4, offset = 0x4, fixed_abs, tag = 'smem constant byte address 0x4 - core index']
  #allocation1 [shape = 'u32[144,128]{1,0:T(1,128)}', space=vmem, size = 0x12000, scoped, tag = 'internal scratch']
  %s0 = inlined_call_operand.hbm [shape: f32[16,32], index: 0, kind: input, shape index: {}]
  %s1 = inlined_call_operand.vmem [shape: f32[1,32], index: 1, kind: input, shape index: {}]
  %s2 = inlined_call_operand.hbm [shape: f32[16,32], index: 2, kind: output, shape index: {}]
  %s3 = sld [smem:[#allocation0]]
  $region22: #{tpu_custom_call.1} parent=0
    _
  %s5 = ssub.s32 1, %s3
  %s6 = scalar_select 0, %s5, %s3
  $region1: #{tpu_custom_call.1} parent=0
    #allocation2 [shape = 'u8[8192]{0}', space=vmem, size = 0x2000, scoped, tag = 'input window, operand 0, single buffered']
    #allocation3 [shape = 's32[1]{0}', space=sflag, size = 0x4, scoped, tag = 'scoped memory for tpu_custom_call.1']
    #allocation4 [shape = 's32[1]{0}', space=sflag, size = 0x4, scoped, tag = 'scoped memory for tpu_custom_call.1']
    #allocation5 [shape = 'u8[8192]{0}', space=vmem, size = 0x2000, scoped, tag = 'output window, operand 0, single buffered']
    %7 = vsyncpa [#allocation3], 0
    %8 = vsyncpa [#allocation4], 0
    // Predicated region
    $region2: #{tpu_custom_call.1} parent=1 // pred_check
      _
    $region3: #{tpu_custom_call.1} parent=1 // pred_check_branch
      %10 = sbr.rel (0) target = $region5
    $region4: #{tpu_custom_call.1} parent=1 // pred_region
      %s12 = ssub.s32 256, 256
      %13 = vsyncadd [#allocation3], %s12
      %s14 = sshll.u32 [#allocation2], 4
      %s15 = int_to_ptr.vmem [resolvable:$true] %s14
      %20 = dma.hbm_to_vmem [thread:$0]  %s0, 256, %s15, [#allocation3], 128, 128, 8
    $region5: #{tpu_custom_call.1} parent=1 // pred_fallthru
      _
    // Predicated region
    $region6: #{tpu_custom_call.1} parent=1 // pred_check
      _
    $region7: #{tpu_custom_call.1} parent=1 // pred_check_branch
      %22 = sbr.rel (0) target = $region9
    $region8: #{tpu_custom_call.1} parent=1 // pred_region
      _
    $region9: #{tpu_custom_call.1} parent=1 // pred_fallthru
      _
    // Predicated region
    $region10: #{tpu_custom_call.1} parent=1 // pred_check
      _
    $region11: #{tpu_custom_call.1} parent=1 // pred_check_branch
      %24 = sbr.rel (0) target = $region13
    $region12: #{tpu_custom_call.1} parent=1 // pred_region
      %25 = dma.done [#allocation3], 256
    $region13: #{tpu_custom_call.1} parent=1 // pred_fallthru
      _
    %v26 = vld [vmem:[#allocation2] sm:$0xff]
    %v27 = vld [vmem:[#allocation2 + $0x8] sm:$0xff]
    %v28 = vmul.f32 %v26, %v26
    %v29 = vmul.f32 %v27, %v27
    %vm30 = vcmask 261120
    %v31 = vsel %vm30, %v28, 0.0
    %32 = vadd.xlane.f32.xlu0 %v31
    %v33 = vpop.xlane.xlu0 %32
    %v34 = vsel %vm30, %v29, 0.0
    %35 = vadd.xlane.f32.xlu0 %v34
    %v36 = vpop.xlane.xlu0 %35
    %v37 = vrcp.pop 32.0
    %v38 = vmul.f32 %v33, %v37
    %v39 = vmul.f32 %v36, %v37
    %v40 = vadd.f32 %v38, 1e-06
    %v41 = vadd.f32 %v39, 1e-06
    %v42 = vrsqrt.pop %v40
    %v43 = vrsqrt.pop %v41
    %v44 = vmul.f32 %v26, %v42
    %v45 = vmul.f32 %v27, %v43
    %v46 = vld [vmem:[%s1] sm:$0x1]
    %v48 = vlaneseq
    %v49 = vshrl.u32 %v48, 7
    %v50 = vsub.s32 0, %v49
    %v51 = vrot.slane %v46, %v50
    %v53 = vmul.f32 %v51, %v44
    %v54 = vmul.f32 %v51, %v45
    %55 = vst.msk [vmem:[#allocation5] sm:$0xff] %vm30, %v53
    %56 = vst.msk [vmem:[#allocation5 + $0x8] sm:$0xff] %vm30, %v54
    // Predicated region
    $region14: #{tpu_custom_call.1} parent=1 // pred_check
      _
    $region15: #{tpu_custom_call.1} parent=1 // pred_check_branch
      %58 = sbr.rel (0) target = $region17
    $region16: #{tpu_custom_call.1} parent=1 // pred_region
      %s60 = ssub.s32 256, 256
      %61 = vsyncadd [#allocation4], %s60
      %s62 = sshll.u32 [#allocation5], 4
      %s63 = int_to_ptr.vmem [resolvable:$true] %s62
      %68 = dma.vmem_to_hbm [thread:$0]  %s63, 256, %s2, [#allocation4], 128, 128, 8
    $region17: #{tpu_custom_call.1} parent=1 // pred_fallthru
      _
    // Predicated region
    $region18: #{tpu_custom_call.1} parent=1 // pred_check
      _
    $region19: #{tpu_custom_call.1} parent=1 // pred_check_branch
      %70 = sbr.rel (0) target = $region21
    $region20: #{tpu_custom_call.1} parent=1 // pred_region
      %71 = dma.done [#allocation4], 256
    $region21: #{tpu_custom_call.1} parent=1 // pred_fallthru
      _
    %72 = vsyncpa [#allocation3], 1
    %73 = vsyncpa [#allocation4], 1

</llo_original>
